<compile_context>
chip_gen: v6e
topology: v6e:2x2x1
jax: 0.10.0
libtpu: 0.0.40
codegen_flags: <defaults>
</compile_context>

<pallas_src>
import jax
import jax.numpy as jnp
from jax.experimental import pallas as pl
from jax.experimental.pallas import tpu as pltpu


def _round_up(n: int, m: int) -> int:
    return ((n + m - 1) // m) * m


def _num_tensorcores() -> int:
    """Dual-TensorCore-per-chip parts (megacore v4/v5p, v7x) -> 2, else 1."""
    try:
        kind = jax.devices()[0].device_kind.lower()
    except Exception:
        return 1
    for tag in ("v7", "v4", "v5p", "v5 p"):
        if tag in kind:
            return 2
    return 1


# ---------------------------------------------------------------------------
# Kernels: bf16 MXU operands, f32 accumulation, f32 biases on the accumulator.
# ---------------------------------------------------------------------------

def _kernel_2mm(x_ref, w1_ref, b1_ref, w23_ref, b23_ref, o_ref):
    """relu(x@W1 + b1) @ (W2@W3) + (b2@W3 + b3)   (folded tail)."""
    x = x_ref[...].astype(jnp.bfloat16)              # cast in-kernel (one HBM pass)
    h = jnp.dot(x, w1_ref[...], preferred_element_type=jnp.float32)
    h = jnp.maximum(h + b1_ref[...], 0.0)
    out = jnp.dot(h.astype(jnp.bfloat16), w23_ref[...],
                  preferred_element_type=jnp.float32)
    o_ref[...] = (out + b23_ref[...]).astype(o_ref.dtype)


def _kernel_3mm(x_ref, w1_ref, b1_ref, w2_ref, b2_ref, w3_ref, b3_ref, o_ref):
    """(relu(x@W1 + b1) @ W2 + b2) @ W3 + b3       (unfolded tail)."""
    x = x_ref[...].astype(jnp.bfloat16)
    h = jnp.dot(x, w1_ref[...], preferred_element_type=jnp.float32)
    h = jnp.maximum(h + b1_ref[...], 0.0)
    z = jnp.dot(h.astype(jnp.bfloat16), w2_ref[...],
                preferred_element_type=jnp.float32) + b2_ref[...]
    out = jnp.dot(z.astype(jnp.bfloat16), w3_ref[...],
                  preferred_element_type=jnp.float32)
    o_ref[...] = (out + b3_ref[...]).astype(o_ref.dtype)


# ---------------------------------------------------------------------------
# Factory: hoists all weight-side preprocessing out of the per-call path.
# ---------------------------------------------------------------------------

def make_encoder_and_head(w1, b1, w2, b2, w3, b3, *, num_tensorcores=None):
    in_dim, hidden = w1.shape
    embed = w2.shape[1]
    n_out = w3.shape[1]
    assert w2.shape == (hidden, embed) and w3.shape == (embed, n_out)

    if num_tensorcores is None:
        num_tensorcores = _num_tensorcores()

    f32 = jnp.float32
    b1f = jnp.asarray(b1, f32).reshape(1, hidden)
    b2f = jnp.asarray(b2, f32).reshape(1, embed)
    b3f = jnp.asarray(b3, f32).reshape(1, n_out)

    # Fold only when it is a strict win (folded W23 no larger than W2 + W3 tail).
    # NOTE: valid because this instantiation has no activation/dropout/norm
    # between the encoder's second Linear and the head.
    fold = n_out <= embed
    if fold:
        w3f = jnp.asarray(w3, f32)
        w23 = (jnp.asarray(w2, f32) @ w3f).astype(jnp.bfloat16)
        b23 = b2f @ w3f + b3f
        weights = (jnp.asarray(w1, jnp.bfloat16), b1f, w23, b23)
        kernel = _kernel_2mm
        tail_flops_per_row = 2 * hidden * n_out
        inner_lanes = _round_up(hidden, 128) + _round_up(n_out, 128)
    else:
        weights = (jnp.asarray(w1, jnp.bfloat16), b1f,
                   jnp.asarray(w2, jnp.bfloat16), b2f,
                   jnp.asarray(w3, jnp.bfloat16), b3f)
        kernel = _kernel_3mm
        tail_flops_per_row = 2 * hidden * embed + 2 * embed * n_out
        inner_lanes = (_round_up(hidden, 128) + _round_up(embed, 128)
                       + _round_up(n_out, 128))

    weight_bytes = sum(int(w.size) * w.dtype.itemsize for w in weights)

    def forward(x):
        batch = x.shape[0]
        assert x.shape[1] == in_dim

        # --- batch tile: one step per TensorCore, capped by a VMEM budget ----
        SUB = 8
        bp8 = _round_up(batch, SUB)
        # bytes/row in VMEM: double-buffered x + out tiles, f32 intermediates.
        per_row = 2 * in_dim * 4 + 2 * n_out * 4 + inner_lanes * 4
        tile_budget = 24 * 1024 * 1024                 # safe on v7x's 64 MiB too
        tb_max = max(SUB, (tile_budget // per_row) // SUB * SUB)
        steps = max(1, num_tensorcores)
        tb = min(_round_up((bp8 + steps - 1) // steps, SUB), tb_max)
        bp = _round_up(bp8, tb)

        x_p = jnp.pad(x, ((0, bp - batch), (0, 0))) if bp != batch else x

        vmem_limit = int(min(64 * 1024 * 1024,
                             max(2 * weight_bytes + tb * per_row + (4 << 20),
                                 16 * 1024 * 1024)))

        # Honest cost estimate: unpadded dims, weights counted once.
        flops = batch * (2 * in_dim * hidden + tail_flops_per_row)
        bytes_accessed = batch * in_dim * 4 + weight_bytes + batch * n_out * 4

        out = pl.pallas_call(
            kernel,
            out_shape=jax.ShapeDtypeStruct((bp, n_out), jnp.float32),
            grid=(bp // tb,),
            in_specs=[pl.BlockSpec((tb, in_dim), lambda i: (i, 0))]     # x tiled
                     + [pl.BlockSpec(w.shape, lambda i: (0, 0))         # resident
                        for w in weights],
            out_specs=pl.BlockSpec((tb, n_out), lambda i: (i, 0)),
            compiler_params=pltpu.CompilerParams(
                dimension_semantics=("parallel",),
                vmem_limit_bytes=vmem_limit),
            cost_estimate=pl.CostEstimate(flops=flops, transcendentals=0,
                                          bytes_accessed=bytes_accessed),
        )(x_p, *weights)

        return out[:batch] if bp != batch else out

    return jax.jit(forward)


def _ref_forward(x, w1, b1, w2, b2, w3, b3):
    h = jnp.maximum(x @ w1 + b1, 0.0)
    z = h @ w2 + b2
    return z @ w3 + b3


if __name__ == "__main__":
    key = jax.random.PRNGKey(0)

    def run_case(batch, in_dim, hidden, embed, n_out, case_key):
        ks = jax.random.split(case_key, 7)
        x = jax.random.normal(ks[0], (batch, in_dim), dtype=jnp.float32)
        w1 = jax.random.normal(ks[1], (in_dim, hidden), dtype=jnp.float32) / jnp.sqrt(in_dim)
        b1 = jax.random.normal(ks[2], (1, hidden), dtype=jnp.float32) * 0.01
        w2 = jax.random.normal(ks[3], (hidden, embed), dtype=jnp.float32) / jnp.sqrt(hidden)
        b2 = jax.random.normal(ks[4], (1, embed), dtype=jnp.float32) * 0.01
        w3 = jax.random.normal(ks[5], (embed, n_out), dtype=jnp.float32) / jnp.sqrt(embed)
        b3 = jax.random.normal(ks[6], (1, n_out), dtype=jnp.float32) * 0.01

        fwd = make_encoder_and_head(w1, b1, w2, b2, w3, b3)
        out = jax.block_until_ready(fwd(x))
        ref = _ref_forward(x, w1, b1, w2, b2, w3, b3)
        assert out.shape == (batch, n_out)
        # bf16 MXU operands with f32 accumulation -> relaxed tolerance vs f32 ref.
        assert jnp.allclose(out, ref, atol=5e-2, rtol=5e-2), "mismatch vs reference"

    # Folded-tail path (n_out <= embed); non-128-aligned dims, batch not a
    # multiple of the tile (exercises the batch-padding / slice path).
    run_case(batch=60, in_dim=48, hidden=96, embed=40, n_out=10, case_key=key)
    # Two-matmul-tail fallback path (n_out > embed).
    run_case(batch=64, in_dim=32, hidden=64, embed=16, n_out=24,
             case_key=jax.random.fold_in(key, 1))

    print("KERNEL_OK")
</pallas_src>

<mosaic_0001>
module attributes {stable_mosaic.version = 11 : i64} {
  func.func @_kernel_2mm(%arg0: i32, %arg1: memref<64x48xf32, #tpu.memory_space<vmem>>, %arg2: memref<48x96xbf16, #tpu.memory_space<vmem>>, %arg3: memref<1x96xf32, #tpu.memory_space<vmem>>, %arg4: memref<96x10xbf16, #tpu.memory_space<vmem>>, %arg5: memref<1x10xf32, #tpu.memory_space<vmem>>, %arg6: memref<64x10xf32, #tpu.memory_space<vmem>>) attributes {dimension_semantics = [#tpu.dimension_semantics<parallel>], iteration_bounds = array<i64: 1>, scalar_prefetch = 0 : i64, scratch_operands = 0 : i64, tpu.core_type = #tpu.core_type<tc>, window_params = [{transform_indices = @transform_0, window_bounds = array<i64: 64, 48>}, {pipeline_mode = #tpu.pipeline_mode<synchronous>, transform_indices = @transform_1, window_bounds = array<i64: 48, 96>}, {pipeline_mode = #tpu.pipeline_mode<synchronous>, transform_indices = @transform_2, window_bounds = array<i64: 1, 96>}, {pipeline_mode = #tpu.pipeline_mode<synchronous>, transform_indices = @transform_3, window_bounds = array<i64: 96, 10>}, {pipeline_mode = #tpu.pipeline_mode<synchronous>, transform_indices = @transform_4, window_bounds = array<i64: 1, 10>}, {transform_indices = @transform_5, window_bounds = array<i64: 64, 10>}]} {
    %c0 = arith.constant 0 : index
    %c0_0 = arith.constant 0 : index
    %0 = vector.load %arg1[%c0, %c0_0] : memref<64x48xf32, #tpu.memory_space<vmem>>, vector<64x48xf32>
    %1 = arith.truncf %0 : vector<64x48xf32> to vector<64x48xbf16>
    %c0_1 = arith.constant 0 : index
    %c0_2 = arith.constant 0 : index
    %2 = vector.load %arg2[%c0_1, %c0_2] : memref<48x96xbf16, #tpu.memory_space<vmem>>, vector<48x96xbf16>
    %cst = arith.constant dense<0.000000e+00> : vector<64x96xf32>
    %3 = tpu.matmul %1, %2, %cst {dimension_numbers = #tpu.dot_dimension_numbers<[1], [0], [0], [1], [0, 0, 1, 1], [], []>} : vector<64x48xbf16>, vector<48x96xbf16>, vector<64x96xf32> -> vector<64x96xf32>
    %c0_3 = arith.constant 0 : index
    %c0_4 = arith.constant 0 : index
    %4 = vector.load %arg3[%c0_3, %c0_4] : memref<1x96xf32, #tpu.memory_space<vmem>>, vector<1x96xf32>
    %5 = vector.broadcast %4 : vector<1x96xf32> to vector<64x96xf32>
    %6 = arith.addf %3, %5 : vector<64x96xf32>
    %cst_5 = arith.constant 0.000000e+00 : f32
    %7 = vector.broadcast %cst_5 : f32 to vector<64x96xf32>
    %8 = arith.maximumf %6, %7 : vector<64x96xf32>
    %9 = arith.truncf %8 : vector<64x96xf32> to vector<64x96xbf16>
    %c0_6 = arith.constant 0 : index
    %c0_7 = arith.constant 0 : index
    %10 = vector.load %arg4[%c0_6, %c0_7] : memref<96x10xbf16, #tpu.memory_space<vmem>>, vector<96x10xbf16>
    %cst_8 = arith.constant dense<0.000000e+00> : vector<64x10xf32>
    %11 = tpu.matmul %9, %10, %cst_8 {dimension_numbers = #tpu.dot_dimension_numbers<[1], [0], [0], [1], [0, 0, 1, 1], [], []>} : vector<64x96xbf16>, vector<96x10xbf16>, vector<64x10xf32> -> vector<64x10xf32>
    %c0_9 = arith.constant 0 : index
    %c0_10 = arith.constant 0 : index
    %12 = vector.load %arg5[%c0_9, %c0_10] : memref<1x10xf32, #tpu.memory_space<vmem>>, vector<1x10xf32>
    %13 = vector.broadcast %12 : vector<1x10xf32> to vector<64x10xf32>
    %14 = arith.addf %11, %13 : vector<64x10xf32>
    %c0_11 = arith.constant 0 : index
    %c0_12 = arith.constant 0 : index
    %15 = vector.load %arg6[%c0_11, %c0_12] : memref<64x10xf32, #tpu.memory_space<vmem>>, vector<64x10xf32>
    tpu.vector_store %arg6[%c0_11, %c0_12], %14 {strides = array<i32>} : memref<64x10xf32, #tpu.memory_space<vmem>>, vector<64x10xf32>,
    return
  }
  func.func @transform_0(%arg0: i32) -> (i32, i32) {
    %c0_i32 = arith.constant 0 : i32
    %c0_i32_0 = arith.constant 0 : i32
    return %arg0, %c0_i32 : i32, i32
  }
  func.func @transform_1(%arg0: i32) -> (i32, i32) {
    %c0_i32 = arith.constant 0 : i32
    %c0_i32_0 = arith.constant 0 : i32
    %c0_i32_1 = arith.constant 0 : i32
    return %c0_i32, %c0_i32_0 : i32, i32
  }
  func.func @transform_2(%arg0: i32) -> (i32, i32) {
    %c0_i32 = arith.constant 0 : i32
    %c0_i32_0 = arith.constant 0 : i32
    %c0_i32_1 = arith.constant 0 : i32
    return %c0_i32, %c0_i32_0 : i32, i32
  }
  func.func @transform_3(%arg0: i32) -> (i32, i32) {
    %c0_i32 = arith.constant 0 : i32
    %c0_i32_0 = arith.constant 0 : i32
    %c0_i32_1 = arith.constant 0 : i32
    return %c0_i32, %c0_i32_0 : i32, i32
  }
  func.func @transform_4(%arg0: i32) -> (i32, i32) {
    %c0_i32 = arith.constant 0 : i32
    %c0_i32_0 = arith.constant 0 : i32
    %c0_i32_1 = arith.constant 0 : i32
    return %c0_i32, %c0_i32_0 : i32, i32
  }
  func.func @transform_5(%arg0: i32) -> (i32, i32) {
    %c0_i32 = arith.constant 0 : i32
    %c0_i32_0 = arith.constant 0 : i32
    return %arg0, %c0_i32 : i32, i32
  }
}

</mosaic_0001>

<llo_original>
// kernel: forward.1
$region0: #{forward.1}
  #allocation0 [shape = 'u32[]', space=smem, size = 0x4, offset = 0x4, fixed_abs, tag = 'smem constant byte address 0x4 - core index']
  #allocation1 [shape = 'u32[144,128]{1,0:T(1,128)}', space=vmem, size = 0x12000, scoped, tag = 'internal scratch']
  %s0 = inlined_call_operand.vmem [shape: f32[64,48], index: 0, kind: input, shape index: {}]
  %s1 = inlined_call_operand.vmem [shape: bf16[48,96], index: 1, kind: input, shape index: {}]
  %s2 = inlined_call_operand.vmem [shape: f32[1,96], index: 2, kind: input, shape index: {}]
  %s3 = inlined_call_operand.vmem [shape: bf16[96,10], index: 3, kind: input, shape index: {}]
  %s4 = inlined_call_operand.vmem [shape: f32[1,10], index: 4, kind: input, shape index: {}]
  %s5 = inlined_call_operand.vmem [shape: f32[64,10], index: 5, kind: output, shape index: {}]
  %s6 = sld [smem:[#allocation0]]
  $region30: #{forward.1} parent=0
    _
  %s8 = ssub.s32 1, %s6
  %s9 = scalar_select 0, %s8, %s6
  // Predicated region
  $region2: #{forward.1} parent=0 // pred_check
    _
  $region3: #{forward.1} parent=0 // pred_check_branch
    %11 = sbr.rel (0) target = $region5
  $region4: #{forward.1} parent=0 // pred_region
    _
  $region5: #{forward.1} parent=0 // pred_fallthru
    _
  // Predicated region
  $region6: #{forward.1} parent=0 // pred_check
    _
  $region7: #{forward.1} parent=0 // pred_check_branch
    %13 = sbr.rel (0) target = $region9
  $region8: #{forward.1} parent=0 // pred_region
    _
  $region9: #{forward.1} parent=0 // pred_fallthru
    _
  // Predicated region
  $region10: #{forward.1} parent=0 // pred_check
    _
  $region11: #{forward.1} parent=0 // pred_check_branch
    %15 = sbr.rel (0) target = $region13
  $region12: #{forward.1} parent=0 // pred_region
    _
  $region13: #{forward.1} parent=0 // pred_fallthru
    _
  // Predicated region
  $region14: #{forward.1} parent=0 // pred_check
    _
  $region15: #{forward.1} parent=0 // pred_check_branch
    %17 = sbr.rel (0) target = $region17
  $region16: #{forward.1} parent=0 // pred_region
    _
  $region17: #{forward.1} parent=0 // pred_fallthru
    _
  // Predicated region
  $region18: #{forward.1} parent=0 // pred_check
    _
  $region19: #{forward.1} parent=0 // pred_check_branch
    %19 = sbr.rel (0) target = $region21
  $region20: #{forward.1} parent=0 // pred_region
    _
  $region21: #{forward.1} parent=0 // pred_fallthru
    _
  %v21 = vld [vmem:[%s0] sm:$0xff]
  %v22 = vld [vmem:[%s0 + $0x8] sm:$0xff]
  %v23 = vld [vmem:[%s0 + $0x10] sm:$0xff]
  %v24 = vld [vmem:[%s0 + $0x18] sm:$0xff]
  %v25 = vld [vmem:[%s0 + $0x20] sm:$0xff]
  %v26 = vld [vmem:[%s0 + $0x28] sm:$0xff]
  %v27 = vld [vmem:[%s0 + $0x30] sm:$0xff]
  %v28 = vld [vmem:[%s0 + $0x38] sm:$0xff]
  %v29 = vpack.c.bf16 %v22, %v21
  %v30 = vpack.c.bf16 %v24, %v23
  %v31 = vpack.c.bf16 %v26, %v25
  %v32 = vpack.c.bf16 %v28, %v27
  %v33 = vld [vmem:[%s1] sm:$0xf]
  %v34 = vld [vmem:[%s1 + $0x4] sm:$0xf]
  %v35 = vld [vmem:[%s1 + $0x8] sm:$0xf]
  %v36 = vld [vmem:[%s1 + $0xc] sm:$0xf]
  %v37 = vld [vmem:[%s1 + $0x10] sm:$0xf]
  %v38 = vld [vmem:[%s1 + $0x14] sm:$0xf]
  %v39 = vld [vmem:[%s2] sm:$0x1]
  %v41 = vlaneseq
  %v42 = vshrl.u32 %v41, 7
  %v43 = vsub.s32 0, %v42
  %v44 = vrot.slane %v39, %v43
  %v52 = vunpack.c.l.b16 %v33
  %v53 = vunpack.c.l.b16 %v34
  %v54 = vunpack.c.l.b16 %v35
  %v55 = vunpack.c.l.b16 %v36
  %v56 = vunpack.c.l.b16 %v37
  %v57 = vunpack.c.l.b16 %v38
  %v58 = vpack.c.b16 %v53, %v52
  %v59 = vpack.c.b16 %v55, %v54
  %v60 = vpack.c.b16 %v57, %v56
  %vm64 = vcmask 392192
  %v66 = vsel %vm64, %v29, 0
  %v69 = vsel %vm64, %v30, 0
  %v72 = vsel %vm64, %v31, 0
  %v75 = vsel %vm64, %v32, 0
  %77 = vmatprep.subr.bf16.mxu0 0
  %78 = vmatpush1.bf16.msra.mxu0 0
  %79 = vmatprep.subr.bf16.mxu0 0
  %80 = vmatpush1.bf16.msra.mxu0 0
  %81 = vmatprep.subr.bf16.mxu0 0
  %82 = vmatpush1.bf16.msra.mxu0 0
  %83 = vmatprep.subr.bf16.mxu0 0
  %84 = vmatpush1.bf16.msra.mxu0 0
  %85 = vmatprep.subr.bf16.mxu0 0
  %86 = vmatpush1.bf16.msra.mxu0 0
  %87 = vmatprep.subr.bf16.mxu0 0
  %88 = vmatpush1.bf16.msra.mxu0 %v60
  %89 = vmatprep.subr.bf16.mxu0 0
  %90 = vmatpush1.bf16.msra.mxu0 %v59
  %91 = vmatprep.subr.bf16.mxu0 0
  %92 = vmatpush1.bf16.msra.mxu0 %v58
  %93 = vmatprep.subr.bf16.mxu0 0
  %94 = vmatpush2.bf16.msra.mxu0 0
  %95 = vmatprep.subr.bf16.mxu0 0
  %96 = vmatpush2.bf16.msra.mxu0 0
  %97 = vmatprep.subr.bf16.mxu0 0
  %98 = vmatpush2.bf16.msra.mxu0 0
  %99 = vmatprep.subr.bf16.mxu0 0
  %100 = vmatpush2.bf16.msra.mxu0 0
  %101 = vmatprep.subr.bf16.mxu0 0
  %102 = vmatpush2.bf16.msra.mxu0 0
  %103 = vmatprep.subr.bf16.mxu0 0
  %104 = vmatpush2.bf16.msra.mxu0 0
  %105 = vmatprep.subr.bf16.mxu0 0
  %106 = vmatpush2.bf16.msra.mxu0 0
  %107 = vmatprep.subr.bf16.mxu0 0
  %108 = vmatpush2.bf16.msra.mxu0 0
  %109 = vmatprep.mubr.bf16.mxu0 0
  %110 = vmatmul.mubr.bf16.gmra.mxu0 %v66
  %v111 = vpop.f32.mrf.mxu0
  %v112 = vadd.f32 %v44, %v111
  %v113 = vpop.f32.mrf.mxu0
  %v114 = vpop.f32.mrf.mxu0
  %v115 = vadd.f32 %v44, %v114
  %v116 = vpop.f32.mrf.mxu0
  %117 = vmatprep.mubr.bf16.mxu0 0
  %118 = vmatmul.mubr.bf16.gmra.mxu0 %v69
  %v119 = vpop.f32.mrf.mxu0
  %v120 = vadd.f32 %v44, %v119
  %v121 = vpop.f32.mrf.mxu0
  %v122 = vpop.f32.mrf.mxu0
  %v123 = vadd.f32 %v44, %v122
  %v124 = vpop.f32.mrf.mxu0
  %125 = vmatprep.mubr.bf16.mxu0 0
  %126 = vmatmul.mubr.bf16.gmra.mxu0 %v72
  %v127 = vpop.f32.mrf.mxu0
  %v128 = vadd.f32 %v44, %v127
  %v129 = vpop.f32.mrf.mxu0
  %v130 = vpop.f32.mrf.mxu0
  %v131 = vadd.f32 %v44, %v130
  %v132 = vpop.f32.mrf.mxu0
  %133 = vmatprep.mubr.bf16.mxu0 0
  %134 = vmatmul.mubr.bf16.gmra.mxu0 %v75
  %v135 = vpop.f32.mrf.mxu0
  %v136 = vadd.f32 %v44, %v135
  %v137 = vpop.f32.mrf.mxu0
  %v138 = vpop.f32.mrf.mxu0
  %v139 = vadd.f32 %v44, %v138
  %v140 = vpop.f32.mrf.mxu0
  %141 = vdwg.mxu0
  %v142 = vmax.f32 %v112, 0.0
  %v143 = vmax.f32 %v115, 0.0
  %v144 = vmax.f32 %v120, 0.0
  %v145 = vmax.f32 %v123, 0.0
  %v146 = vmax.f32 %v128, 0.0
  %v147 = vmax.f32 %v131, 0.0
  %v148 = vmax.f32 %v136, 0.0
  %v149 = vmax.f32 %v139, 0.0
  %v150 = vpack.c.bf16 %v143, %v142
  %v151 = vpack.c.bf16 %v145, %v144
  %v152 = vpack.c.bf16 %v147, %v146
  %v153 = vpack.c.bf16 %v149, %v148
  %v154 = vld [vmem:[%s3] sm:$0xf]
  %v155 = vld [vmem:[%s3 + $0x4] sm:$0xf]
  %v156 = vld [vmem:[%s3 + $0x8] sm:$0xf]
  %v157 = vld [vmem:[%s3 + $0xc] sm:$0xf]
  %v158 = vld [vmem:[%s3 + $0x10] sm:$0xf]
  %v159 = vld [vmem:[%s3 + $0x14] sm:$0xf]
  %v160 = vld [vmem:[%s3 + $0x18] sm:$0xf]
  %v161 = vld [vmem:[%s3 + $0x1c] sm:$0xf]
  %v162 = vld [vmem:[%s3 + $0x20] sm:$0xf]
  %v163 = vld [vmem:[%s3 + $0x24] sm:$0xf]
  %v164 = vld [vmem:[%s3 + $0x28] sm:$0xf]
  %v165 = vld [vmem:[%s3 + $0x2c] sm:$0xf]
  %v166 = vld [vmem:[%s4] sm:$0x1]
  %v168 = vlaneseq
  %v169 = vshrl.u32 %v168, 7
  %v170 = vsub.s32 0, %v169
  %v171 = vrot.slane %v166, %v170
  %v185 = vunpack.c.l.b16 %v154
  %v186 = vunpack.c.l.b16 %v155
  %v187 = vunpack.c.l.b16 %v156
  %v188 = vunpack.c.l.b16 %v157
  %v189 = vunpack.c.l.b16 %v158
  %v190 = vunpack.c.l.b16 %v159
  %v191 = vunpack.c.l.b16 %v160
  %v192 = vunpack.c.l.b16 %v161
  %v193 = vunpack.c.l.b16 %v162
  %v194 = vunpack.c.l.b16 %v163
  %v195 = vunpack.c.l.b16 %v164
  %v196 = vunpack.c.l.b16 %v165
  %v197 = vpack.c.b16 %v186, %v185
  %v198 = vpack.c.b16 %v188, %v187
  %v199 = vpack.c.b16 %v190, %v189
  %v200 = vpack.c.b16 %v192, %v191
  %v201 = vpack.c.b16 %v194, %v193
  %v202 = vpack.c.b16 %v196, %v195
  %vm209 = vcmask 785408
  %v211 = vsel %vm209, %v150, 0
  %v214 = vsel %vm209, %v151, 0
  %v217 = vsel %vm209, %v152, 0
  %v220 = vsel %vm209, %v153, 0
  %222 = vmatprep.subr.bf16.mxu0 0
  %223 = vmatpush1.bf16.msra.mxu0 0
  %224 = vmatprep.subr.bf16.mxu0 0
  %225 = vmatpush1.bf16.msra.mxu0 0
  %226 = vmatprep.subr.bf16.mxu0 0
  %227 = vmatpush1.bf16.msra.mxu0 %v202
  %228 = vmatprep.subr.bf16.mxu0 0
  %229 = vmatpush1.bf16.msra.mxu0 %v201
  %230 = vmatprep.subr.bf16.mxu0 0
  %231 = vmatpush1.bf16.msra.mxu0 %v200
  %232 = vmatprep.subr.bf16.mxu0 0
  %233 = vmatpush1.bf16.msra.mxu0 %v199
  %234 = vmatprep.subr.bf16.mxu0 0
  %235 = vmatpush1.bf16.msra.mxu0 %v198
  %236 = vmatprep.subr.bf16.mxu0 0
  %237 = vmatpush1.bf16.msra.mxu0 %v197
  %238 = vmatprep.subr.bf16.mxu0 0
  %239 = vmatpush2.bf16.msra.mxu0 0
  %240 = vmatprep.subr.bf16.mxu0 0
  %241 = vmatpush2.bf16.msra.mxu0 0
  %242 = vmatprep.subr.bf16.mxu0 0
  %243 = vmatpush2.bf16.msra.mxu0 0
  %244 = vmatprep.subr.bf16.mxu0 0
  %245 = vmatpush2.bf16.msra.mxu0 0
  %246 = vmatprep.subr.bf16.mxu0 0
  %247 = vmatpush2.bf16.msra.mxu0 0
  %248 = vmatprep.subr.bf16.mxu0 0
  %249 = vmatpush2.bf16.msra.mxu0 0
  %250 = vmatprep.subr.bf16.mxu0 0
  %251 = vmatpush2.bf16.msra.mxu0 0
  %252 = vmatprep.subr.bf16.mxu0 0
  %253 = vmatpush2.bf16.msra.mxu0 0
  %254 = vmatprep.mubr.bf16.mxu0 0
  %255 = vmatmul.mubr.bf16.gmra.mxu0 %v211
  %v256 = vpop.f32.mrf.mxu0
  %v257 = vadd.f32 %v171, %v256
  %v258 = vpop.f32.mrf.mxu0
  %v259 = vpop.f32.mrf.mxu0
  %v260 = vadd.f32 %v171, %v259
  %v261 = vpop.f32.mrf.mxu0
  %262 = vmatprep.mubr.bf16.mxu0 0
  %263 = vmatmul.mubr.bf16.gmra.mxu0 %v214
  %v264 = vpop.f32.mrf.mxu0
  %v265 = vadd.f32 %v171, %v264
  %v266 = vpop.f32.mrf.mxu0
  %v267 = vpop.f32.mrf.mxu0
  %v268 = vadd.f32 %v171, %v267
  %v269 = vpop.f32.mrf.mxu0
  %270 = vmatprep.mubr.bf16.mxu0 0
  %271 = vmatmul.mubr.bf16.gmra.mxu0 %v217
  %v272 = vpop.f32.mrf.mxu0
  %v273 = vadd.f32 %v171, %v272
  %v274 = vpop.f32.mrf.mxu0
  %v275 = vpop.f32.mrf.mxu0
  %v276 = vadd.f32 %v171, %v275
  %v277 = vpop.f32.mrf.mxu0
  %278 = vmatprep.mubr.bf16.mxu0 0
  %279 = vmatmul.mubr.bf16.gmra.mxu0 %v220
  %v280 = vpop.f32.mrf.mxu0
  %v281 = vadd.f32 %v171, %v280
  %v282 = vpop.f32.mrf.mxu0
  %v283 = vpop.f32.mrf.mxu0
  %v284 = vadd.f32 %v171, %v283
  %v285 = vpop.f32.mrf.mxu0
  %286 = vdwg.mxu0
  %vm287 = vcmask 80896
  %288 = vst.msk [vmem:[%s5] sm:$0xff] %vm287, %v257
  %289 = vst.msk [vmem:[%s5 + $0x8] sm:$0xff] %vm287, %v260
  %290 = vst.msk [vmem:[%s5 + $0x10] sm:$0xff] %vm287, %v265
  %291 = vst.msk [vmem:[%s5 + $0x18] sm:$0xff] %vm287, %v268
  %292 = vst.msk [vmem:[%s5 + $0x20] sm:$0xff] %vm287, %v273
  %293 = vst.msk [vmem:[%s5 + $0x28] sm:$0xff] %vm287, %v276
  %294 = vst.msk [vmem:[%s5 + $0x30] sm:$0xff] %vm287, %v281
  %295 = vst.msk [vmem:[%s5 + $0x38] sm:$0xff] %vm287, %v284
  // Predicated region
  $region22: #{forward.1} parent=0 // pred_check
    _
  $region23: #{forward.1} parent=0 // pred_check_branch
    %297 = sbr.rel (0) target = $region25
  $region24: #{forward.1} parent=0 // pred_region
    _
  $region25: #{forward.1} parent=0 // pred_fallthru
    _
  // Predicated region
  $region26: #{forward.1} parent=0 // pred_check
    _
  $region27: #{forward.1} parent=0 // pred_check_branch
    %299 = sbr.rel (0) target = $region29
  $region28: #{forward.1} parent=0 // pred_region
    _
  $region29: #{forward.1} parent=0 // pred_fallthru
    _

</llo_original>
